<compile_context>
chip_gen: v5e
topology: v5e:2x2
jax: 0.10.0
libtpu: 0.0.40
codegen_flags: <defaults>
</compile_context>

<pallas_src>
import jax
import jax.numpy as jnp
from jax.experimental import pallas as pl
from jax.experimental.pallas import tpu as pltpu


def _round_up(x, m):
    return ((x + m - 1) // m) * m


def _linear11_kernel(x_ref, w_ref, b_ref, o_ref):
    # w_ref / b_ref are (1, 1) f32 scalars in SMEM (no vreg / DMA cost).
    w = w_ref[0, 0]
    b = b_ref[0, 0]
    o_ref[...] = x_ref[...] * w + b


def linear11_pallas(x, w, b, *, max_block_rows=2048, min_grid_steps=4):
    """x: [N, 1] f32 (N % 128 == 0), w/b: [1, 1] f32 -> [N, 1] f32."""
    n = x.shape[0]
    assert n % 128 == 0, "pallas path needs 128-aligned N (dispatch handles rest)"
    m = n // 128
    slab = x.reshape(m, 128)  # lane-dense view; bitcast-compatible, no copy

    # Tile rows: large enough to amortize per-grid-step overhead, small enough
    # that the grid has >= min_grid_steps steps (v7x megacore sharding of the
    # "parallel" axis).  Cap at 2048 rows (1 MiB/tile): double-buffered in+out
    # ~4 MiB, well under v5e 16 MiB / v6e+v7x 32 MiB default scoped VMEM.
    rows = max(8, min(max_block_rows, _round_up(pl.cdiv(m, min_grid_steps), 8)))
    grid = (pl.cdiv(m, rows),)  # ragged last block masked by Pallas on writeback

    out = pl.pallas_call(
        _linear11_kernel,
        out_shape=jax.ShapeDtypeStruct((m, 128), x.dtype),
        grid=grid,
        in_specs=[
            pl.BlockSpec((rows, 128), lambda i: (i, 0)),   # lane-dense x tile
            pl.BlockSpec(memory_space=pltpu.SMEM),         # weight scalar
            pl.BlockSpec(memory_space=pltpu.SMEM),         # bias scalar
        ],
        out_specs=pl.BlockSpec((rows, 128), lambda i: (i, 0)),
        compiler_params=pltpu.CompilerParams(
            dimension_semantics=("parallel",),
        ),
        cost_estimate=pl.CostEstimate(
            flops=2 * m * 128,                 # one mul + one add per element
            bytes_accessed=2 * m * 128 * 4,    # read x, write out (f32)
            transcendentals=0,
        ),
    )(slab, w, b)

    return out.reshape(n, 1)


# Below this (or for non-128-aligned N) the plain fused x*w+b wins: it hits the
# HBM roofline, fuses with producers/consumers, and avoids custom-call overhead.
_PALLAS_MIN_N = 1 << 18


def linear11(x, w, b):
    """Dispatch: fused jnp for small / unaligned batches, Pallas otherwise."""
    n = x.shape[0]
    if n >= _PALLAS_MIN_N and n % 128 == 0:
        return linear11_pallas(x, w, b)
    return x * w[0, 0] + b[0, 0]


if __name__ == "__main__":
    key = jax.random.PRNGKey(0)
    kw, kb, k1, k2, k3 = jax.random.split(key, 5)

    # Deterministic Linear(1, 1) parameters (synthetic init, no checkpoint).
    w = jax.random.uniform(kw, (1, 1), dtype=jnp.float32, minval=-1.0, maxval=1.0)
    b = jax.random.uniform(kb, (1, 1), dtype=jnp.float32, minval=-1.0, maxval=1.0)

    def ref(x):
        return x * w[0, 0] + b[0, 0]

    # 1) Module-sized small batch: dispatch takes the fused-jnp fast path.
    x_small = jax.random.normal(k1, (8, 1), dtype=jnp.float32)
    out_small = jax.block_until_ready(linear11(x_small, w, b))
    assert out_small.shape == (8, 1)
    assert jnp.allclose(out_small, ref(x_small), atol=1e-6), "small-N mismatch"

    # 2) Pallas kernel directly: 128-aligned N, evenly divided grid.
    x_al = jax.random.normal(k2, (1024, 1), dtype=jnp.float32)
    out_al = jax.block_until_ready(linear11_pallas(x_al, w, b))
    assert out_al.shape == (1024, 1)
    assert jnp.allclose(out_al, ref(x_al), atol=1e-6), "aligned pallas mismatch"

    # 3) Pallas kernel with a ragged last grid block (m=11 rows, 8-row tiles,
    #    grid=(2,)) to exercise masked writeback — still no pad/slice copies.
    x_rag = jax.random.normal(k3, (11 * 128, 1), dtype=jnp.float32)
    out_rag = jax.block_until_ready(linear11_pallas(x_rag, w, b))
    assert out_rag.shape == (11 * 128, 1)
    assert jnp.allclose(out_rag, ref(x_rag), atol=1e-6), "ragged pallas mismatch"

    print("KERNEL_OK")
</pallas_src>

<mosaic_0001>
module attributes {stable_mosaic.version = 11 : i64} {
  func.func @_linear11_kernel(%arg0: i32, %arg1: memref<8x128xf32, #tpu.memory_space<vmem>>, %arg2: memref<1x1xf32, #tpu.memory_space<smem>>, %arg3: memref<1x1xf32, #tpu.memory_space<smem>>, %arg4: memref<8x128xf32, #tpu.memory_space<vmem>>) attributes {dimension_semantics = [#tpu.dimension_semantics<parallel>], iteration_bounds = array<i64: 1>, scalar_prefetch = 0 : i64, scratch_operands = 0 : i64, tpu.core_type = #tpu.core_type<tc>, window_params = [{transform_indices = @transform_0, window_bounds = array<i64: 8, 128>}, {transform_indices = @transform_1, window_bounds = array<i64: 1, 1>}, {transform_indices = @transform_2, window_bounds = array<i64: 1, 1>}, {transform_indices = @transform_3, window_bounds = array<i64: 8, 128>}]} {
    %c0 = arith.constant 0 : index
    %c0_0 = arith.constant 0 : index
    %0 = memref.load %arg2[%c0, %c0_0] : memref<1x1xf32, #tpu.memory_space<smem>>
    %c0_1 = arith.constant 0 : index
    %c0_2 = arith.constant 0 : index
    %1 = memref.load %arg3[%c0_1, %c0_2] : memref<1x1xf32, #tpu.memory_space<smem>>
    %c0_3 = arith.constant 0 : index
    %c0_4 = arith.constant 0 : index
    %2 = vector.load %arg1[%c0_3, %c0_4] : memref<8x128xf32, #tpu.memory_space<vmem>>, vector<8x128xf32>
    %3 = vector.broadcast %0 : f32 to vector<8x128xf32>
    %4 = arith.mulf %2, %3 : vector<8x128xf32>
    %5 = vector.broadcast %1 : f32 to vector<8x128xf32>
    %6 = arith.addf %4, %5 : vector<8x128xf32>
    %c0_5 = arith.constant 0 : index
    %c0_6 = arith.constant 0 : index
    %7 = vector.load %arg4[%c0_5, %c0_6] : memref<8x128xf32, #tpu.memory_space<vmem>>, vector<8x128xf32>
    tpu.vector_store %arg4[%c0_5, %c0_6], %6 {strides = array<i32>} : memref<8x128xf32, #tpu.memory_space<vmem>>, vector<8x128xf32>,
    return
  }
  func.func @transform_0(%arg0: i32) -> (i32, i32) {
    %c0_i32 = arith.constant 0 : i32
    %c0_i32_0 = arith.constant 0 : i32
    return %arg0, %c0_i32 : i32, i32
  }
  func.func @transform_1(%arg0: i32) -> (i32, i32) {
    %c0_i32 = arith.constant 0 : i32
    %c0_i32_0 = arith.constant 0 : i32
    %c0_i32_1 = arith.constant 0 : i32
    return %c0_i32, %c0_i32_0 : i32, i32
  }
  func.func @transform_2(%arg0: i32) -> (i32, i32) {
    %c0_i32 = arith.constant 0 : i32
    %c0_i32_0 = arith.constant 0 : i32
    %c0_i32_1 = arith.constant 0 : i32
    return %c0_i32, %c0_i32_0 : i32, i32
  }
  func.func @transform_3(%arg0: i32) -> (i32, i32) {
    %c0_i32 = arith.constant 0 : i32
    %c0_i32_0 = arith.constant 0 : i32
    return %arg0, %c0_i32 : i32, i32
  }
}

</mosaic_0001>

<llo_original>
// kernel: tpu_custom_call.1
$region0: #{tpu_custom_call.1}
  #allocation0 [shape = 'u32[]', space=smem, size = 0x4, offset = 0x4, fixed_abs, tag = 'smem constant byte address 0x4 - core index']
  #allocation1 [shape = 'u32[72,128]{1,0:T(1,128)}', space=vmem, size = 0x9000, scoped, tag = 'internal scratch']
  #allocation2 [shape = 'f32[1,1]{1,0:T(1,128)S(6)}', space=smem, size = 0x200, scoped, tag = 'scoped memory for tpu_custom_call.1']
  #allocation3 [shape = 'f32[1,1]{1,0:T(1,128)S(6)}', space=smem, size = 0x200, scoped, tag = 'scoped memory for tpu_custom_call.1']
  %s0 = inlined_call_operand.hbm [shape: f32[8,128], index: 0, kind: input, shape index: {}]
  %s1 = inlined_call_operand.<no memory space> [shape: f32[1,1], index: 1, kind: input, shape index: {}]
  %s2 = inlined_call_operand.<no memory space> [shape: f32[1,1], index: 2, kind: input, shape index: {}]
  %s3 = inlined_call_operand.hbm [shape: f32[8,128], index: 3, kind: output, shape index: {}]
  %s4 = sld [smem:[#allocation0]]
  $region26: #{tpu_custom_call.1} parent=0
    _
  %s6 = ssub.s32 1, %s4
  %s7 = scalar_select 0, %s6, %s4
  %8 = sst [smem:[#allocation2]] %s1
  %9 = sst [smem:[#allocation3]] %s2
  $region1: #{tpu_custom_call.1} parent=0
    #allocation4 [shape = 'u8[4096]{0}', space=vmem, size = 0x1000, scoped, tag = 'input window, operand 0, single buffered']
    #allocation5 [shape = 's32[1]{0}', space=sflag, size = 0x4, scoped, tag = 'scoped memory for tpu_custom_call.1']
    #allocation6 [shape = 's32[1]{0}', space=sflag, size = 0x4, scoped, tag = 'scoped memory for tpu_custom_call.1']
    #allocation7 [shape = 'u8[4096]{0}', space=vmem, size = 0x1000, scoped, tag = 'output window, operand 0, single buffered']
    %10 = vsyncpa [#allocation5], 0
    %11 = vsyncpa [#allocation6], 0
    // Predicated region
    $region2: #{tpu_custom_call.1} parent=1 // pred_check
      _
    $region3: #{tpu_custom_call.1} parent=1 // pred_check_branch
      %13 = sbr.rel (0) target = $region5
    $region4: #{tpu_custom_call.1} parent=1 // pred_region
      %15 = vsyncadd [#allocation5], 0
      %s17 = sshll.u32 %s0, 4
      %s18 = int_to_ptr.hbm [resolvable:$true] %s17
      %s19 = sshll.u32 [#allocation4], 4
      %s20 = int_to_ptr.vmem [resolvable:$true] %s19
      %22 = dma.hbm_to_vmem [thread:$0]  %s18, 128, %s20, [#allocation5]
    $region5: #{tpu_custom_call.1} parent=1 // pred_fallthru
      _
    // Predicated region
    $region6: #{tpu_custom_call.1} parent=1 // pred_check
      _
    $region7: #{tpu_custom_call.1} parent=1 // pred_check_branch
      %24 = sbr.rel (0) target = $region9
    $region8: #{tpu_custom_call.1} parent=1 // pred_region
      _
    $region9: #{tpu_custom_call.1} parent=1 // pred_fallthru
      _
    // Predicated region
    $region10: #{tpu_custom_call.1} parent=1 // pred_check
      _
    $region11: #{tpu_custom_call.1} parent=1 // pred_check_branch
      %26 = sbr.rel (0) target = $region13
    $region12: #{tpu_custom_call.1} parent=1 // pred_region
      _
    $region13: #{tpu_custom_call.1} parent=1 // pred_fallthru
      _
    // Predicated region
    $region14: #{tpu_custom_call.1} parent=1 // pred_check
      _
    $region15: #{tpu_custom_call.1} parent=1 // pred_check_branch
      %28 = sbr.rel (0) target = $region17
    $region16: #{tpu_custom_call.1} parent=1 // pred_region
      %30 = dma.done [#allocation5], 128
    $region17: #{tpu_custom_call.1} parent=1 // pred_fallthru
      _
    %s31 = sld [smem:[#allocation2]]
    %s32 = sld [smem:[#allocation3]]
    %v33 = vld [vmem:[#allocation4] sm:$0xff]
    %v34 = vstv %s31
    %v35 = vmul.f32 %v33, %v34
    %v36 = vstv %s32
    %v37 = vadd.f32 %v35, %v36
    %38 = vst [vmem:[#allocation7] sm:$0xff] %v37
    // Predicated region
    $region18: #{tpu_custom_call.1} parent=1 // pred_check
      _
    $region19: #{tpu_custom_call.1} parent=1 // pred_check_branch
      %40 = sbr.rel (0) target = $region21
    $region20: #{tpu_custom_call.1} parent=1 // pred_region
      %42 = vsyncadd [#allocation6], 0
      %s44 = sshll.u32 [#allocation7], 4
      %s45 = int_to_ptr.vmem [resolvable:$true] %s44
      %s46 = sshll.u32 %s3, 4
      %s47 = int_to_ptr.hbm [resolvable:$true] %s46
      %49 = dma.vmem_to_hbm [thread:$0]  %s45, 128, %s47, [#allocation6]
    $region21: #{tpu_custom_call.1} parent=1 // pred_fallthru
      _
    // Predicated region
    $region22: #{tpu_custom_call.1} parent=1 // pred_check
      _
    $region23: #{tpu_custom_call.1} parent=1 // pred_check_branch
      %51 = sbr.rel (0) target = $region25
    $region24: #{tpu_custom_call.1} parent=1 // pred_region
      %53 = dma.done [#allocation6], 128
    $region25: #{tpu_custom_call.1} parent=1 // pred_fallthru
      _
    %54 = vsyncpa [#allocation5], 1
    %55 = vsyncpa [#allocation6], 1

</llo_original>
